<compile_context>
chip_gen: v6e
topology: v6e:2x2x1
jax: 0.10.0
libtpu: 0.0.40
codegen_flags: <defaults>
</compile_context>

<pallas_src>
import functools

import jax
import jax.numpy as jnp
from jax import lax
from jax.experimental import pallas as pl
from jax.experimental.pallas import tpu as pltpu

_MIB = 1024 * 1024


def _num_tensorcores():
    """Best-effort TensorCore count (1 on v5e/v6e, 2 on megacore parts)."""
    try:
        info = pltpu.get_tpu_info()
    except Exception:
        return 1
    for name in ("num_cores", "core_count", "num_tensorcores", "tensorcore_count"):
        v = getattr(info, name, None)
        if isinstance(v, int) and v > 0:
            return v
    return 1


def _physical_vmem_bytes():
    try:
        return int(pltpu.get_tpu_info().vmem_capacity_bytes)
    except Exception:
        return 64 * _MIB  # conservative: v7x per-TensorCore size


def _cosine_csa_kernel(x_ref, y_ref, ceq_ref, sel_ref, out_ref, *,
                       margin, eps, n_rows, pack, block_rows,
                       tiles_per_partial):
    c = pl.program_id(0)   # partial-sum slot (parallel axis, one per TC)
    i = pl.program_id(1)   # reduction step within this slot (arbitrary axis)

    @pl.when(i == 0)
    def _init():
        out_ref[0, 0] = jnp.float32(0.0)

    x = x_ref[...]          # (tn, lane_w)  native dtype, lane-dense
    y = y_ref[...]          # (tn, lane_w)
    sel = sel_ref[...]      # (lane_w, pack) 0/1 segment selector

    # Elementwise products stay in the input dtype (bf16 VPU on v6e/v7x);
    # the MXU dot against the 0/1 selector performs the per-row D-reduction
    # and accumulates in f32 (XLU/VALU stay free, MXU was idle anyway).
    ip = jnp.dot(x * y, sel, preferred_element_type=jnp.float32)   # (tn, pack)
    sx = jnp.dot(x * x, sel, preferred_element_type=jnp.float32)
    sy = jnp.dot(y * y, sel, preferred_element_type=jnp.float32)

    # cosine = ip / max(||x||*||y||, eps) == ip * min(rsqrt(sx)*rsqrt(sy), 1/eps)
    # (overflow-safe: sx*sy is never formed).  rsqrt runs on the EUP.
    inv = jnp.minimum(lax.rsqrt(sx) * lax.rsqrt(sy), jnp.float32(1.0 / eps))
    cosine = ip * inv
    dist = 1.0 - cosine

    ceq = ceq_ref[...].astype(jnp.float32)                          # (tn, pack)
    hinge = jnp.maximum(margin - dist, 0.0)
    loss = ceq * dist * dist + (1.0 - ceq) * hinge * hinge          # (tn, pack)

    # Exact masking of rows past the true batch size: covers the pack padding,
    # the ragged last tile, and any clamped/idle extra grid steps.  Uses the
    # UNclamped tile index so re-read tiles contribute exactly zero.  Garbage
    # values in padding rows are discarded by the select (no NaN propagation).
    tile_idx = c * tiles_per_partial + i
    row0 = tile_idx * block_rows * pack
    prow = lax.broadcasted_iota(jnp.int32, loss.shape, 0)
    col = lax.broadcasted_iota(jnp.int32, loss.shape, 1)
    orig_row = row0 + prow * pack + col
    loss = jnp.where(orig_row < n_rows, loss, 0.0)

    out_ref[0, 0] += jnp.sum(loss)


def cosine_csa(x, y, class_eq, *, margin=0.4, eps=1e-8,
               max_block_rows=16384, num_partials=None):
    """x: (N, D), y: (N, D), class_eq: (N,) -> scalar float32 mean loss."""
    n, d = x.shape
    assert y.shape == (n, d) and class_eq.shape == (n,)

    # --- lane-dense repack: fold `pack` rows onto the 128-lane axis ---------
    pack = (128 // d) if (d < 128 and 128 % d == 0) else 1
    lane_w = d * pack
    n_pad = pl.cdiv(n, pack) * pack
    if n_pad != n:
        pad = n_pad - n
        x = jnp.concatenate([x, jnp.zeros((pad, d), x.dtype)], axis=0)
        y = jnp.concatenate([y, jnp.zeros((pad, d), y.dtype)], axis=0)
        class_eq = jnp.concatenate(
            [class_eq, jnp.zeros((pad,), class_eq.dtype)], axis=0)
    n_p = n_pad // pack
    xp = x.reshape(n_p, lane_w)
    yp = y.reshape(n_p, lane_w)
    ceq = class_eq.astype(jnp.float32).reshape(n_p, pack)

    # 0/1 segment selector: column j sums lanes [j*d, (j+1)*d).
    sel = (jnp.arange(lane_w, dtype=jnp.int32)[:, None] // d
           == jnp.arange(pack, dtype=jnp.int32)[None, :]).astype(x.dtype)

    # --- generation-aware, lane-padding-aware VMEM budget --------------------
    phys_vmem = _physical_vmem_bytes()
    budget = min(phys_vmem // 4, 24 * _MIB)          # total pipelined buffers
    vmem_limit = min(phys_vmem * 3 // 4, budget + 16 * _MIB)

    lane_pad = pl.cdiv(lane_w, 128) * 128            # VMEM lane padding of x/y
    ceq_lane_pad = pl.cdiv(pack, 128) * 128          # VMEM lane padding of ceq
    bytes_per_prow = 2 * lane_pad * x.dtype.itemsize + ceq_lane_pad * 4
    rows_cap = max(8, (budget // 2) // bytes_per_prow // 8 * 8)  # 2x = dbl-buf
    rows_cap = min(rows_cap, int(max_block_rows))
    tn = n_p if n_p <= rows_cap else rows_cap        # %8==0 or == full extent
    num_tiles = pl.cdiv(n_p, tn)

    # --- megacore split of the partial sums ----------------------------------
    if num_partials is None:
        num_partials = _num_tensorcores()
    num_partials = max(1, min(int(num_partials), num_tiles, 8))
    tiles_per_partial = pl.cdiv(num_tiles, num_partials)
    needs_clamp = num_partials * tiles_per_partial > num_tiles

    def _tile(c, i):
        t = c * tiles_per_partial + i
        return jnp.minimum(t, num_tiles - 1) if needs_clamp else t

    kernel = functools.partial(
        _cosine_csa_kernel,
        margin=float(margin), eps=float(eps), n_rows=n, pack=pack,
        block_rows=tn, tiles_per_partial=tiles_per_partial)

    cost = pl.CostEstimate(
        flops=14 * n * d,
        transcendentals=2 * n,
        bytes_accessed=2 * n_p * lane_w * x.dtype.itemsize
        + n_p * pack * 4 + num_partials * 4)

    partials = pl.pallas_call(
        kernel,
        out_shape=jax.ShapeDtypeStruct((num_partials, 1), jnp.float32),
        grid_spec=pltpu.PrefetchScalarGridSpec(
            num_scalar_prefetch=0,
            grid=(num_partials, tiles_per_partial),
            in_specs=[
                pl.BlockSpec((tn, lane_w), lambda c, i: (_tile(c, i), 0)),
                pl.BlockSpec((tn, lane_w), lambda c, i: (_tile(c, i), 0)),
                pl.BlockSpec((tn, pack), lambda c, i: (_tile(c, i), 0)),
                pl.BlockSpec((lane_w, pack), lambda c, i: (0, 0)),  # resident
            ],
            out_specs=pl.BlockSpec((1, 1), lambda c, i: (c, 0),
                                   memory_space=pltpu.SMEM),
        ),
        compiler_params=pltpu.CompilerParams(
            dimension_semantics=("parallel", "arbitrary"),
            vmem_limit_bytes=int(vmem_limit)),
        cost_estimate=cost,
    )(xp, yp, ceq, sel)

    return jnp.sum(partials) / jnp.float32(n)


def _reference(x, y, class_eq, margin=0.4, eps=1e-8):
    xf = x.astype(jnp.float32)
    yf = y.astype(jnp.float32)
    ip = jnp.sum(xf * yf, axis=1)
    w1 = jnp.sqrt(jnp.sum(xf * xf, axis=1))
    w2 = jnp.sqrt(jnp.sum(yf * yf, axis=1))
    cosine = ip / jnp.maximum(w1 * w2, eps)
    dist = 1.0 - cosine
    loss = (class_eq * dist ** 2
            + (1.0 - class_eq) * jnp.maximum(margin - dist, 0.0) ** 2)
    return jnp.mean(loss)


if __name__ == "__main__":
    # Deterministic parameter from __init__: margin = 0.4.
    MARGIN = 0.4

    key = jax.random.PRNGKey(0)
    k1, k2, k3 = jax.random.split(key, 3)

    N, D = 8, 32  # batch of 8 embedding pairs, hidden dim 32
    x = jax.random.normal(k1, (N, D), dtype=jnp.float32)
    y = jax.random.normal(k2, (N, D), dtype=jnp.float32)
    class_eq = jax.random.bernoulli(k3, 0.5, (N,)).astype(jnp.float32)

    out = cosine_csa(x, y, class_eq, margin=MARGIN)
    out = jax.block_until_ready(out)

    ref = _reference(x, y, class_eq, margin=MARGIN)
    assert jnp.allclose(out, ref, atol=1e-5, rtol=1e-5), (out, ref)

    print("KERNEL_OK")
</pallas_src>

<mosaic_0001>
module attributes {stable_mosaic.version = 11 : i64} {
  func.func @_cosine_csa_kernel(%arg0: i32, %arg1: i32, %arg2: memref<2x128xf32, #tpu.memory_space<vmem>>, %arg3: memref<2x128xf32, #tpu.memory_space<vmem>>, %arg4: memref<2x4xf32, #tpu.memory_space<vmem>>, %arg5: memref<128x4xf32, #tpu.memory_space<vmem>>, %arg6: memref<1x1xf32, #tpu.memory_space<smem>>) attributes {dimension_semantics = [#tpu.dimension_semantics<parallel>, #tpu.dimension_semantics<arbitrary>], iteration_bounds = array<i64: 1, 1>, scalar_prefetch = 0 : i64, scratch_operands = 0 : i64, tpu.core_type = #tpu.core_type<tc>, window_params = [{transform_indices = @transform_0, window_bounds = array<i64: 2, 128>}, {transform_indices = @transform_1, window_bounds = array<i64: 2, 128>}, {transform_indices = @transform_2, window_bounds = array<i64: 2, 4>}, {pipeline_mode = #tpu.pipeline_mode<synchronous>, transform_indices = @transform_3, window_bounds = array<i64: 128, 4>}, {transform_indices = @transform_4, window_bounds = array<i64: 1, 1>}]} {
    %c0_i32 = arith.constant 0 : i32
    %0 = arith.cmpi eq, %arg1, %c0_i32 : i32
    %1 = arith.extui %0 : i1 to i32
    %c0_i32_0 = arith.constant 0 : i32
    %2 = arith.cmpi ne, %1, %c0_i32_0 : i32
    scf.if %2 {
      %cst_22 = arith.constant 0.000000e+00 : f32
      %c0_23 = arith.constant 0 : index
      %c0_24 = arith.constant 0 : index
      %54 = memref.load %arg6[%c0_23, %c0_24] : memref<1x1xf32, #tpu.memory_space<smem>>
      memref.store %cst_22, %arg6[%c0_23, %c0_24] : memref<1x1xf32, #tpu.memory_space<smem>>
    } else {
    }
    %c0 = arith.constant 0 : index
    %c0_1 = arith.constant 0 : index
    %3 = vector.load %arg2[%c0, %c0_1] : memref<2x128xf32, #tpu.memory_space<vmem>>, vector<2x128xf32>
    %c0_2 = arith.constant 0 : index
    %c0_3 = arith.constant 0 : index
    %4 = vector.load %arg3[%c0_2, %c0_3] : memref<2x128xf32, #tpu.memory_space<vmem>>, vector<2x128xf32>
    %c0_4 = arith.constant 0 : index
    %c0_5 = arith.constant 0 : index
    %5 = vector.load %arg5[%c0_4, %c0_5] : memref<128x4xf32, #tpu.memory_space<vmem>>, vector<128x4xf32>
    %6 = arith.mulf %3, %4 : vector<2x128xf32>
    %cst = arith.constant dense<0.000000e+00> : vector<2x4xf32>
    %7 = tpu.matmul %6, %5, %cst {dimension_numbers = #tpu.dot_dimension_numbers<[1], [0], [0], [1], [0, 0, 1, 1], [], []>} : vector<2x128xf32>, vector<128x4xf32>, vector<2x4xf32> -> vector<2x4xf32>
    %8 = arith.mulf %3, %3 : vector<2x128xf32>
    %cst_6 = arith.constant dense<0.000000e+00> : vector<2x4xf32>
    %9 = tpu.matmul %8, %5, %cst_6 {dimension_numbers = #tpu.dot_dimension_numbers<[1], [0], [0], [1], [0, 0, 1, 1], [], []>} : vector<2x128xf32>, vector<128x4xf32>, vector<2x4xf32> -> vector<2x4xf32>
    %10 = arith.mulf %4, %4 : vector<2x128xf32>
    %cst_7 = arith.constant dense<0.000000e+00> : vector<2x4xf32>
    %11 = tpu.matmul %10, %5, %cst_7 {dimension_numbers = #tpu.dot_dimension_numbers<[1], [0], [0], [1], [0, 0, 1, 1], [], []>} : vector<2x128xf32>, vector<128x4xf32>, vector<2x4xf32> -> vector<2x4xf32>
    %12 = math.rsqrt %9 : vector<2x4xf32>
    %13 = math.rsqrt %11 : vector<2x4xf32>
    %14 = arith.mulf %12, %13 : vector<2x4xf32>
    %cst_8 = arith.constant 1.000000e+08 : f32
    %15 = vector.broadcast %cst_8 : f32 to vector<2x4xf32>
    %16 = arith.minimumf %14, %15 : vector<2x4xf32>
    %17 = arith.mulf %7, %16 : vector<2x4xf32>
    %cst_9 = arith.constant 1.000000e+00 : f32
    %18 = vector.broadcast %cst_9 : f32 to vector<2x4xf32>
    %19 = arith.subf %18, %17 : vector<2x4xf32>
    %c0_10 = arith.constant 0 : index
    %c0_11 = arith.constant 0 : index
    %20 = vector.load %arg4[%c0_10, %c0_11] : memref<2x4xf32, #tpu.memory_space<vmem>>, vector<2x4xf32>
    %cst_12 = arith.constant 4.000000e-01 : f32
    %21 = vector.broadcast %cst_12 : f32 to vector<2x4xf32>
    %22 = arith.subf %21, %19 : vector<2x4xf32>
    %cst_13 = arith.constant 0.000000e+00 : f32
    %23 = vector.broadcast %cst_13 : f32 to vector<2x4xf32>
    %24 = arith.maximumf %22, %23 : vector<2x4xf32>
    %25 = arith.mulf %20, %19 : vector<2x4xf32>
    %26 = arith.mulf %25, %19 : vector<2x4xf32>
    %cst_14 = arith.constant 1.000000e+00 : f32
    %27 = vector.broadcast %cst_14 : f32 to vector<2x4xf32>
    %28 = arith.subf %27, %20 : vector<2x4xf32>
    %29 = arith.mulf %28, %24 : vector<2x4xf32>
    %30 = arith.mulf %29, %24 : vector<2x4xf32>
    %31 = arith.addf %26, %30 : vector<2x4xf32>
    %c1_i32 = arith.constant 1 : i32
    %32 = arith.muli %arg0, %c1_i32 : i32
    %33 = arith.addi %32, %arg1 : i32
    %c2_i32 = arith.constant 2 : i32
    %34 = arith.muli %33, %c2_i32 : i32
    %c4_i32 = arith.constant 4 : i32
    %35 = arith.muli %34, %c4_i32 : i32
    %36 = tpu.iota {dimensions = array<i32: 0>} : vector<2x4xi32>
    %37 = tpu.iota {dimensions = array<i32: 1>} : vector<2x4xi32>
    %c4_i32_15 = arith.constant 4 : i32
    %38 = vector.broadcast %c4_i32_15 : i32 to vector<2x4xi32>
    %39 = arith.muli %36, %38 : vector<2x4xi32>
    %40 = vector.broadcast %35 : i32 to vector<2x4xi32>
    %41 = arith.addi %40, %39 : vector<2x4xi32>
    %42 = arith.addi %41, %37 : vector<2x4xi32>
    %c8_i32 = arith.constant 8 : i32
    %43 = vector.broadcast %c8_i32 : i32 to vector<2x4xi32>
    %44 = arith.cmpi slt, %42, %43 : vector<2x4xi32>
    %cst_16 = arith.constant 0.000000e+00 : f32
    %45 = vector.broadcast %cst_16 : f32 to vector<2x4xf32>
    %46 = arith.select %44, %31, %45 : vector<2x4xi1>, vector<2x4xf32>
    %c0_17 = arith.constant 0 : index
    %c0_18 = arith.constant 0 : index
    %47 = memref.load %arg6[%c0_17, %c0_18] : memref<1x1xf32, #tpu.memory_space<smem>>
    %48 = vector.shape_cast %46 : vector<2x4xf32> to vector<1x2x4xf32>
    %cst_19 = arith.constant dense<0.000000e+00> : vector<1xf32>
    %49 = vector.multi_reduction <add>, %48, %cst_19 [1, 2] : vector<1x2x4xf32> to vector<1xf32>
    %50 = vector.shape_cast %49 : vector<1xf32> to vector<1x1x1xf32>
    %51 = vector.extract %50[0, 0, 0] : f32 from vector<1x1x1xf32>
    %52 = arith.addf %47, %51 : f32
    %c0_20 = arith.constant 0 : index
    %c0_21 = arith.constant 0 : index
    %53 = memref.load %arg6[%c0_20, %c0_21] : memref<1x1xf32, #tpu.memory_space<smem>>
    memref.store %52, %arg6[%c0_20, %c0_21] : memref<1x1xf32, #tpu.memory_space<smem>>
    return
  }
  func.func @transform_0(%arg0: i32, %arg1: i32) -> (i32, i32) {
    %c1_i32 = arith.constant 1 : i32
    %0 = arith.muli %arg0, %c1_i32 : i32
    %1 = arith.addi %0, %arg1 : i32
    %c0_i32 = arith.constant 0 : i32
    %c0_i32_0 = arith.constant 0 : i32
    return %1, %c0_i32 : i32, i32
  }
  func.func @transform_1(%arg0: i32, %arg1: i32) -> (i32, i32) {
    %c1_i32 = arith.constant 1 : i32
    %0 = arith.muli %arg0, %c1_i32 : i32
    %1 = arith.addi %0, %arg1 : i32
    %c0_i32 = arith.constant 0 : i32
    %c0_i32_0 = arith.constant 0 : i32
    return %1, %c0_i32 : i32, i32
  }
  func.func @transform_2(%arg0: i32, %arg1: i32) -> (i32, i32) {
    %c1_i32 = arith.constant 1 : i32
    %0 = arith.muli %arg0, %c1_i32 : i32
    %1 = arith.addi %0, %arg1 : i32
    %c0_i32 = arith.constant 0 : i32
    %c0_i32_0 = arith.constant 0 : i32
    return %1, %c0_i32 : i32, i32
  }
  func.func @transform_3(%arg0: i32, %arg1: i32) -> (i32, i32) {
    %c0_i32 = arith.constant 0 : i32
    %c0_i32_0 = arith.constant 0 : i32
    %c0_i32_1 = arith.constant 0 : i32
    return %c0_i32, %c0_i32_0 : i32, i32
  }
  func.func @transform_4(%arg0: i32, %arg1: i32) -> (i32, i32) {
    %c0_i32 = arith.constant 0 : i32
    %c0_i32_0 = arith.constant 0 : i32
    return %arg0, %c0_i32 : i32, i32
  }
}

</mosaic_0001>

<llo_original>
// kernel: tpu_custom_call.1
$region0: #{tpu_custom_call.1}
  #allocation0 [shape = 'u32[]', space=smem, size = 0x4, offset = 0x4, fixed_abs, tag = 'smem constant byte address 0x4 - core index']
  #allocation1 [shape = 'u32[144,128]{1,0:T(1,128)}', space=vmem, size = 0x12000, scoped, tag = 'internal scratch']
  %s0 = inlined_call_operand.vmem [shape: f32[2,128], index: 0, kind: input, shape index: {}]
  %s1 = inlined_call_operand.vmem [shape: f32[2,128], index: 1, kind: input, shape index: {}]
  %s2 = inlined_call_operand.vmem [shape: f32[2,4], index: 2, kind: input, shape index: {}]
  %s3 = inlined_call_operand.vmem [shape: f32[128,4], index: 3, kind: input, shape index: {}]
  %s4 = inlined_call_operand.hbm [shape: f32[1,1], index: 4, kind: output, shape index: {}]
  %s5 = sld [smem:[#allocation0]]
  $region30: #{tpu_custom_call.1} parent=0
    _
  %s7 = ssub.s32 1, %s5
  %s8 = scalar_select 0, %s7, %s5
  $region1: #{tpu_custom_call.1} parent=0
    #allocation2 [shape = 'u8[512]{0}', space=smem, size = 0x200, scoped, tag = 'output window, operand 0, single buffered']
    #allocation3 [shape = 's32[1]{0}', space=sflag, size = 0x4, scoped, tag = 'scoped memory for tpu_custom_call.1']
    %9 = vsyncpa [#allocation3], 0
    // Predicated region
    $region2: #{tpu_custom_call.1} parent=1 // pred_check
      _
    $region3: #{tpu_custom_call.1} parent=1 // pred_check_branch
      %11 = sbr.rel (0) target = $region5
    $region4: #{tpu_custom_call.1} parent=1 // pred_region
      %s12 = sadd.s32 0, 0
      %p13 = scmp.lt.s32.totalorder %s12, 0
      %s14 = scalar_select %p13, %s12, 0
      %s15 = smul.addr %s14, 2
      %s16 = scalar_lea.vmem %s0, %s15
      %s17 = sadd.s32 0, 0
    $region5: #{tpu_custom_call.1} parent=1 // pred_fallthru
      _
    // Predicated region
    $region6: #{tpu_custom_call.1} parent=1 // pred_check
      _
    $region7: #{tpu_custom_call.1} parent=1 // pred_check_branch
      %19 = sbr.rel (0) target = $region9
    $region8: #{tpu_custom_call.1} parent=1 // pred_region
      %s20 = sadd.s32 0, 0
      %p21 = scmp.lt.s32.totalorder %s20, 0
      %s22 = scalar_select %p21, %s20, 0
      %s23 = smul.addr %s22, 2
      %s24 = scalar_lea.vmem %s1, %s23
      %s25 = sadd.s32 0, 0
    $region9: #{tpu_custom_call.1} parent=1 // pred_fallthru
      _
    // Predicated region
    $region10: #{tpu_custom_call.1} parent=1 // pred_check
      _
    $region11: #{tpu_custom_call.1} parent=1 // pred_check_branch
      %27 = sbr.rel (0) target = $region13
    $region12: #{tpu_custom_call.1} parent=1 // pred_region
      %s28 = sadd.s32 0, 0
      %p29 = scmp.lt.s32.totalorder %s28, 0
      %s30 = scalar_select %p29, %s28, 0
      %s31 = smul.addr %s30, 2
      %s32 = scalar_lea.vmem %s2, %s31
      %s33 = sadd.s32 0, 0
    $region13: #{tpu_custom_call.1} parent=1 // pred_fallthru
      _
    // Predicated region
    $region14: #{tpu_custom_call.1} parent=1 // pred_check
      _
    $region15: #{tpu_custom_call.1} parent=1 // pred_check_branch
      %35 = sbr.rel (0) target = $region17
    $region16: #{tpu_custom_call.1} parent=1 // pred_region
      _
    $region17: #{tpu_custom_call.1} parent=1 // pred_fallthru
      _
    %s36 = sadd.s32 0, 0
    %p37 = scmp.lt.s32.totalorder %s36, 0
    %s38 = scalar_select %p37, %s36, 0
    %s39 = smul.addr %s38, 2
    %s40 = scalar_lea.vmem %s0, %s39
    %s41 = sadd.s32 0, 0
    %p42 = scmp.lt.s32.totalorder %s41, 0
    %s43 = scalar_select %p42, %s41, 0
    %s44 = smul.addr %s43, 2
    %s45 = scalar_lea.vmem %s1, %s44
    %s46 = sadd.s32 0, 0
    %p47 = scmp.lt.s32.totalorder %s46, 0
    %s48 = scalar_select %p47, %s46, 0
    %s49 = smul.addr %s48, 2
    %s50 = scalar_lea.vmem %s2, %s49
    %s51 = sadd.s32 0, 0
    %p52 = scmp.lt.s32.totalorder %s51, 0
    %s53 = scalar_select %p52, %s51, 0
    %s54 = smul.addr %s53, 2
    %s55 = scalar_lea.vmem %s0, %s54
    %s56 = sadd.s32 0, 0
    %s57 = sadd.s32 0, 0
    %p58 = scmp.lt.s32.totalorder %s57, 0
    %s59 = scalar_select %p58, %s57, 0
    %s60 = smul.addr %s59, 2
    %s61 = scalar_lea.vmem %s1, %s60
    %s62 = sadd.s32 0, 0
    %s63 = sadd.s32 0, 0
    %p64 = scmp.lt.s32.totalorder %s63, 0
    %s65 = scalar_select %p64, %s63, 0
    %s66 = smul.addr %s65, 2
    %s67 = scalar_lea.vmem %s2, %s66
    %s68 = sadd.s32 0, 0
    %p69 = scmp.eq.s32.totalorder 0, 0
    // Predicated region
    $region18: #{tpu_custom_call.1} parent=1 // pred_check
      %p70 = pneg %p69
    $region19: #{tpu_custom_call.1} parent=1 // pred_check_branch
      %72 = sbr.rel (%p70) target = $region21
    $region20: #{tpu_custom_call.1} parent=1 // pred_region
      %s73 = scalar_lea.smem [#allocation2], 0
      %74 = sst [smem:[%s73]] 0.0
    $region21: #{tpu_custom_call.1} parent=1 // pred_fallthru
      _
    %v75 = vld [vmem:[%s55] sm:$0x3]
    %v76 = vld [vmem:[%s61] sm:$0x3]
    %v77 = vld [vmem:[%s3] sm:$0xff]
    %v78 = vld [vmem:[%s3 + $0x8] sm:$0xff]
    %v79 = vld [vmem:[%s3 + $0x10] sm:$0xff]
    %v80 = vld [vmem:[%s3 + $0x18] sm:$0xff]
    %v81 = vld [vmem:[%s3 + $0x20] sm:$0xff]
    %v82 = vld [vmem:[%s3 + $0x28] sm:$0xff]
    %v83 = vld [vmem:[%s3 + $0x30] sm:$0xff]
    %v84 = vld [vmem:[%s3 + $0x38] sm:$0xff]
    %v85 = vld [vmem:[%s3 + $0x40] sm:$0xff]
    %v86 = vld [vmem:[%s3 + $0x48] sm:$0xff]
    %v87 = vld [vmem:[%s3 + $0x50] sm:$0xff]
    %v88 = vld [vmem:[%s3 + $0x58] sm:$0xff]
    %v89 = vld [vmem:[%s3 + $0x60] sm:$0xff]
    %v90 = vld [vmem:[%s3 + $0x68] sm:$0xff]
    %v91 = vld [vmem:[%s3 + $0x70] sm:$0xff]
    %v92 = vld [vmem:[%s3 + $0x78] sm:$0xff]
    %v93 = vmul.f32 %v75, %v76
    %94 = vmatprep.subr.mxu0 0.0
    %95 = vmatpush1.msra.mxu0 %v92
    %96 = vmatprep.subr.mxu0 0.0
    %97 = vmatpush1.msra.mxu0 %v91
    %98 = vmatprep.subr.mxu0 0.0
    %99 = vmatpush1.msra.mxu0 %v90
    %100 = vmatprep.subr.mxu0 0.0
    %101 = vmatpush1.msra.mxu0 %v89
    %102 = vmatprep.subr.mxu0 0.0
    %103 = vmatpush1.msra.mxu0 %v88
    %104 = vmatprep.subr.mxu0 0.0
    %105 = vmatpush1.msra.mxu0 %v87
    %106 = vmatprep.subr.mxu0 0.0
    %107 = vmatpush1.msra.mxu0 %v86
    %108 = vmatprep.subr.mxu0 0.0
    %109 = vmatpush1.msra.mxu0 %v85
    %110 = vmatprep.subr.mxu0 0.0
    %111 = vmatpush1.msra.mxu0 %v84
    %112 = vmatprep.subr.mxu0 0.0
    %113 = vmatpush1.msra.mxu0 %v83
    %114 = vmatprep.subr.mxu0 0.0
    %115 = vmatpush1.msra.mxu0 %v82
    %116 = vmatprep.subr.mxu0 0.0
    %117 = vmatpush1.msra.mxu0 %v81
    %118 = vmatprep.subr.mxu0 0.0
    %119 = vmatpush1.msra.mxu0 %v80
    %120 = vmatprep.subr.mxu0 0.0
    %121 = vmatpush1.msra.mxu0 %v79
    %122 = vmatprep.subr.mxu0 0.0
    %123 = vmatpush1.msra.mxu0 %v78
    %124 = vmatprep.subr.mxu0 0.0
    %125 = vmatpush1.msra.mxu0 %v77
    %126 = vmatprep.subr.mxu0 0.0
    %127 = vmatpush2.msra.mxu0 0.0
    %128 = vmatprep.subr.mxu0 0.0
    %129 = vmatpush2.msra.mxu0 0.0
    %130 = vmatprep.subr.mxu0 0.0
    %131 = vmatpush2.msra.mxu0 0.0
    %132 = vmatprep.subr.mxu0 0.0
    %133 = vmatpush2.msra.mxu0 0.0
    %134 = vmatprep.subr.mxu0 0.0
    %135 = vmatpush2.msra.mxu0 0.0
    %136 = vmatprep.subr.mxu0 0.0
    %137 = vmatpush2.msra.mxu0 0.0
    %138 = vmatprep.subr.mxu0 0.0
    %139 = vmatpush2.msra.mxu0 0.0
    %140 = vmatprep.subr.mxu0 0.0
    %141 = vmatpush2.msra.mxu0 0.0
    %142 = vmatprep.subr.mxu0 0.0
    %143 = vmatpush2.msra.mxu0 0.0
    %144 = vmatprep.subr.mxu0 0.0
    %145 = vmatpush2.msra.mxu0 0.0
    %146 = vmatprep.subr.mxu0 0.0
    %147 = vmatpush2.msra.mxu0 0.0
    %148 = vmatprep.subr.mxu0 0.0
    %149 = vmatpush2.msra.mxu0 0.0
    %150 = vmatprep.subr.mxu0 0.0
    %151 = vmatpush2.msra.mxu0 0.0
    %152 = vmatprep.subr.mxu0 0.0
    %153 = vmatpush2.msra.mxu0 0.0
    %154 = vmatprep.subr.mxu0 0.0
    %155 = vmatpush2.msra.mxu0 0.0
    %156 = vmatprep.subr.mxu0 0.0
    %157 = vmatpush2.msra.mxu0 0.0
    %158 = vmatprep.mubr.f32.mxu0 0.0
    %159 = vmatmul.mubr.f32.gmra.mxu0 %v93
    %v160 = vpop.f32.mrf.mxu0
    %v161 = vadd.f32 0.0, %v160
    %v162 = vpop.f32.mrf.mxu0
    %163 = vdwg.mxu0
    %v164 = vmul.f32 %v75, %v75
    %165 = vmatprep.subr.mxu0 0.0
    %166 = vmatpush1.msra.mxu0 %v92
    %167 = vmatprep.subr.mxu0 0.0
    %168 = vmatpush1.msra.mxu0 %v91
    %169 = vmatprep.subr.mxu0 0.0
    %170 = vmatpush1.msra.mxu0 %v90
    %171 = vmatprep.subr.mxu0 0.0
    %172 = vmatpush1.msra.mxu0 %v89
    %173 = vmatprep.subr.mxu0 0.0
    %174 = vmatpush1.msra.mxu0 %v88
    %175 = vmatprep.subr.mxu0 0.0
    %176 = vmatpush1.msra.mxu0 %v87
    %177 = vmatprep.subr.mxu0 0.0
    %178 = vmatpush1.msra.mxu0 %v86
    %179 = vmatprep.subr.mxu0 0.0
    %180 = vmatpush1.msra.mxu0 %v85
    %181 = vmatprep.subr.mxu0 0.0
    %182 = vmatpush1.msra.mxu0 %v84
    %183 = vmatprep.subr.mxu0 0.0
    %184 = vmatpush1.msra.mxu0 %v83
    %185 = vmatprep.subr.mxu0 0.0
    %186 = vmatpush1.msra.mxu0 %v82
    %187 = vmatprep.subr.mxu0 0.0
    %188 = vmatpush1.msra.mxu0 %v81
    %189 = vmatprep.subr.mxu0 0.0
    %190 = vmatpush1.msra.mxu0 %v80
    %191 = vmatprep.subr.mxu0 0.0
    %192 = vmatpush1.msra.mxu0 %v79
    %193 = vmatprep.subr.mxu0 0.0
    %194 = vmatpush1.msra.mxu0 %v78
    %195 = vmatprep.subr.mxu0 0.0
    %196 = vmatpush1.msra.mxu0 %v77
    %197 = vmatprep.subr.mxu0 0.0
    %198 = vmatpush2.msra.mxu0 0.0
    %199 = vmatprep.subr.mxu0 0.0
    %200 = vmatpush2.msra.mxu0 0.0
    %201 = vmatprep.subr.mxu0 0.0
    %202 = vmatpush2.msra.mxu0 0.0
    %203 = vmatprep.subr.mxu0 0.0
    %204 = vmatpush2.msra.mxu0 0.0
    %205 = vmatprep.subr.mxu0 0.0
    %206 = vmatpush2.msra.mxu0 0.0
    %207 = vmatprep.subr.mxu0 0.0
    %208 = vmatpush2.msra.mxu0 0.0
    %209 = vmatprep.subr.mxu0 0.0
    %210 = vmatpush2.msra.mxu0 0.0
    %211 = vmatprep.subr.mxu0 0.0
    %212 = vmatpush2.msra.mxu0 0.0
    %213 = vmatprep.subr.mxu0 0.0
    %214 = vmatpush2.msra.mxu0 0.0
    %215 = vmatprep.subr.mxu0 0.0
    %216 = vmatpush2.msra.mxu0 0.0
    %217 = vmatprep.subr.mxu0 0.0
    %218 = vmatpush2.msra.mxu0 0.0
    %219 = vmatprep.subr.mxu0 0.0
    %220 = vmatpush2.msra.mxu0 0.0
    %221 = vmatprep.subr.mxu0 0.0
    %222 = vmatpush2.msra.mxu0 0.0
    %223 = vmatprep.subr.mxu0 0.0
    %224 = vmatpush2.msra.mxu0 0.0
    %225 = vmatprep.subr.mxu0 0.0
    %226 = vmatpush2.msra.mxu0 0.0
    %227 = vmatprep.subr.mxu0 0.0
    %228 = vmatpush2.msra.mxu0 0.0
    %229 = vmatprep.mubr.f32.mxu0 0.0
    %230 = vmatmul.mubr.f32.gmra.mxu0 %v164
    %v231 = vpop.f32.mrf.mxu0
    %v232 = vadd.f32 0.0, %v231
    %v233 = vpop.f32.mrf.mxu0
    %234 = vdwg.mxu0
    %v235 = vmul.f32 %v76, %v76
    %236 = vmatprep.subr.mxu0 0.0
    %237 = vmatpush1.msra.mxu0 %v92
    %238 = vmatprep.subr.mxu0 0.0
    %239 = vmatpush1.msra.mxu0 %v91
    %240 = vmatprep.subr.mxu0 0.0
    %241 = vmatpush1.msra.mxu0 %v90
    %242 = vmatprep.subr.mxu0 0.0
    %243 = vmatpush1.msra.mxu0 %v89
    %244 = vmatprep.subr.mxu0 0.0
    %245 = vmatpush1.msra.mxu0 %v88
    %246 = vmatprep.subr.mxu0 0.0
    %247 = vmatpush1.msra.mxu0 %v87
    %248 = vmatprep.subr.mxu0 0.0
    %249 = vmatpush1.msra.mxu0 %v86
    %250 = vmatprep.subr.mxu0 0.0
    %251 = vmatpush1.msra.mxu0 %v85
    %252 = vmatprep.subr.mxu0 0.0
    %253 = vmatpush1.msra.mxu0 %v84
    %254 = vmatprep.subr.mxu0 0.0
    %255 = vmatpush1.msra.mxu0 %v83
    %256 = vmatprep.subr.mxu0 0.0
    %257 = vmatpush1.msra.mxu0 %v82
    %258 = vmatprep.subr.mxu0 0.0
    %259 = vmatpush1.msra.mxu0 %v81
    %260 = vmatprep.subr.mxu0 0.0
    %261 = vmatpush1.msra.mxu0 %v80
    %262 = vmatprep.subr.mxu0 0.0
    %263 = vmatpush1.msra.mxu0 %v79
    %264 = vmatprep.subr.mxu0 0.0
    %265 = vmatpush1.msra.mxu0 %v78
    %266 = vmatprep.subr.mxu0 0.0
    %267 = vmatpush1.msra.mxu0 %v77
    %268 = vmatprep.subr.mxu0 0.0
    %269 = vmatpush2.msra.mxu0 0.0
    %270 = vmatprep.subr.mxu0 0.0
    %271 = vmatpush2.msra.mxu0 0.0
    %272 = vmatprep.subr.mxu0 0.0
    %273 = vmatpush2.msra.mxu0 0.0
    %274 = vmatprep.subr.mxu0 0.0
    %275 = vmatpush2.msra.mxu0 0.0
    %276 = vmatprep.subr.mxu0 0.0
    %277 = vmatpush2.msra.mxu0 0.0
    %278 = vmatprep.subr.mxu0 0.0
    %279 = vmatpush2.msra.mxu0 0.0
    %280 = vmatprep.subr.mxu0 0.0
    %281 = vmatpush2.msra.mxu0 0.0
    %282 = vmatprep.subr.mxu0 0.0
    %283 = vmatpush2.msra.mxu0 0.0
    %284 = vmatprep.subr.mxu0 0.0
    %285 = vmatpush2.msra.mxu0 0.0
    %286 = vmatprep.subr.mxu0 0.0
    %287 = vmatpush2.msra.mxu0 0.0
    %288 = vmatprep.subr.mxu0 0.0
    %289 = vmatpush2.msra.mxu0 0.0
    %290 = vmatprep.subr.mxu0 0.0
    %291 = vmatpush2.msra.mxu0 0.0
    %292 = vmatprep.subr.mxu0 0.0
    %293 = vmatpush2.msra.mxu0 0.0
    %294 = vmatprep.subr.mxu0 0.0
    %295 = vmatpush2.msra.mxu0 0.0
    %296 = vmatprep.subr.mxu0 0.0
    %297 = vmatpush2.msra.mxu0 0.0
    %298 = vmatprep.subr.mxu0 0.0
    %299 = vmatpush2.msra.mxu0 0.0
    %300 = vmatprep.mubr.f32.mxu0 0.0
    %301 = vmatmul.mubr.f32.gmra.mxu0 %v235
    %v302 = vpop.f32.mrf.mxu0
    %v303 = vadd.f32 0.0, %v302
    %v304 = vpop.f32.mrf.mxu0
    %305 = vdwg.mxu0
    %v306 = vrsqrt.pop %v232
    %v307 = vrsqrt.pop %v303
    %v308 = vmul.f32 %v306, %v307
    %v309 = vmin.f32 %v308, 1e+08
    %v310 = vmul.f32 %v161, %v309
    %v311 = vsub.f32 1.0, %v310
    %v312 = vld [vmem:[%s67] sm:$0x3]
    %v313 = vsub.f32 0.4, %v311
    %v314 = vmax.f32 %v313, 0.0
    %v315 = vmul.f32 %v312, %v311
    %v316 = vmul.f32 %v315, %v311
    %v317 = vsub.f32 1.0, %v312
    %v318 = vmul.f32 %v317, %v314
    %v319 = vmul.f32 %v318, %v314
    %v320 = vadd.f32 %v316, %v319
    %s321 = sadd.s32 0, 0
    %s322 = smul.u32 %s321, 8
    %v323 = vlaneseq
    %v324 = vshrl.u32 %v323, 7
    %v325 = vlaneseq
    %v326 = vand.u32 %v325, 127
    %v327 = vmul.u32 %v324, 4
    %v328 = vstv %s322
    %v329 = vadd.s32 %v328, %v327
    %v330 = vadd.s32 %v329, %v326
    %vm331 = vcmp.lt.s32.totalorder %v330, 8
    %v332 = vsel %vm331, %v320, 0.0
    %s333 = sld [smem:[#allocation2]]
    %vm334 = vcmask 25600
    %v335 = vsel %vm334, %v332, 0.0
    %336 = vadd.xlane.f32.xlu0 %v335
    %v337 = vpop.xlane.xlu0 %336
    %v338 = vrot.slane %v337, 4
    %v339 = vadd.f32 %v337, %v338
    %v340 = vrot.slane %v339, 2
    %v341 = vadd.f32 %v339, %v340
    %v342 = vrot.slane %v341, 1
    %v343 = vadd.f32 %v341, %v342
    %s344 = vtos %v343
    %s345 = sadd.f32 %s333, %s344
    %s346 = scalar_lea.smem [#allocation2], 0
    %347 = sst [smem:[%s346]] %s345
    // Predicated region
    $region22: #{tpu_custom_call.1} parent=1 // pred_check
      _
    $region23: #{tpu_custom_call.1} parent=1 // pred_check_branch
      %349 = sbr.rel (0) target = $region25
    $region24: #{tpu_custom_call.1} parent=1 // pred_region
      %s351 = ssub.s32 16, 16
      %352 = vsyncadd [#allocation3], %s351
      %355 = dma.smem_to_hbm [#allocation2], 16, %s4, [#allocation3]
    $region25: #{tpu_custom_call.1} parent=1 // pred_fallthru
      _
    // Predicated region
    $region26: #{tpu_custom_call.1} parent=1 // pred_check
      _
    $region27: #{tpu_custom_call.1} parent=1 // pred_check_branch
      %357 = sbr.rel (0) target = $region29
    $region28: #{tpu_custom_call.1} parent=1 // pred_region
      %358 = dma.done [#allocation3], 16
    $region29: #{tpu_custom_call.1} parent=1 // pred_fallthru
      _
    %359 = sfence
    %360 = vsyncpa [#allocation3], 1

</llo_original>
